<compile_context>
chip_gen: v7x
topology: tpu7x:2x2x1
jax: 0.10.0
libtpu: 0.0.40
codegen_flags: <defaults>
</compile_context>

<pallas_src>
import jax
import jax.numpy as jnp
from jax import lax
from jax.experimental import pallas as pl
from jax.experimental.pallas import tpu as pltpu

_LANE = 128
_SUBLANE = 8


def _round_up(x, m):
    return ((x + m - 1) // m) * m


def _pad2d(x, rows, cols):
    x = jnp.asarray(x, jnp.float32)
    return jnp.pad(x, ((0, rows - x.shape[0]), (0, cols - x.shape[1])))


# ----------------------------------------------------------------------------
# Kernel: one grid step == one chunk of T_BLK recurrent timesteps.
# ----------------------------------------------------------------------------
def cfn_chunk_kernel(ws_ref, wact_ref, b_ref, s0_ref, act_ref, out_ref,
                     s_ref, pre_ref):
    """
    ws_ref   : (n_pad, 2*n_pad)      resident [Uz^T | Ui^T]
    wact_ref : (n_a_pad, 3*n_pad)    resident [Wz^T | Wi^T | Wa^T]
    b_ref    : (1, 3*n_pad)          resident [bz | bi | 0]
    s0_ref   : (1, n_pad)            initial state
    act_ref  : (T_BLK, n_a_pad)      actions for this chunk
    out_ref  : (T_BLK, n_pad)        next-state for each step of this chunk
    s_ref    : (1, n_pad)            VMEM scratch carrying the recurrent state
    pre_ref  : (T_BLK, 3*n_pad)      VMEM scratch: precomputed action terms
    """
    n_pad = s_ref.shape[1]
    t_blk = act_ref.shape[0]

    @pl.when(pl.program_id(0) == 0)
    def _():
        s_ref[...] = s0_ref[...]

    # ---- off-critical-path per-chunk precompute (MXU, M = T_BLK) -----------
    #   pre[t] = a_t @ [Wz^T | Wi^T | Wa^T] + [bz | bi | 0]
    pre = jnp.dot(act_ref[...], wact_ref[...],
                  preferred_element_type=jnp.float32) + b_ref[...]
    pre_ref[:, 0:2 * n_pad] = pre[:, 0:2 * n_pad]
    # tanh(Wa @ a_t) for the whole chunk, once, vectorized (off serial chain).
    pre_ref[:, 2 * n_pad:3 * n_pad] = jnp.tanh(pre[:, 2 * n_pad:3 * n_pad])

    # ---- serial recurrence over the chunk -----------------------------------
    def step(t, state):
        # state @ [Uz^T | Ui^T] : the only state-dependent matmul.
        y = jnp.dot(state, ws_ref[...], preferred_element_type=jnp.float32)
        row = pre_ref[pl.ds(t, 1), :]                      # (1, 3*n_pad)
        zt = jnp.tanh(y[:, 0:n_pad] + row[:, 0:n_pad])
        it = jnp.tanh(y[:, n_pad:2 * n_pad] + row[:, n_pad:2 * n_pad])
        new_state = zt * jnp.tanh(state) + it * row[:, 2 * n_pad:3 * n_pad]
        out_ref[pl.ds(t, 1), :] = new_state                # lane-dense row store
        return new_state

    s_ref[...] = lax.fori_loop(0, t_blk, step, s_ref[...])


# ----------------------------------------------------------------------------
# Parameter packing (padded, lane-aligned, biases folded into a resident row).
# ----------------------------------------------------------------------------
def pack_params(params):
    uz, ui, wa, wi, wz, bz, bi = params
    n_state = uz.shape[0]
    n_action = wa.shape[1]
    n_pad = _round_up(max(n_state, 1), _LANE)
    n_a_pad = _round_up(max(n_action, 1), _LANE)

    w_state = jnp.concatenate(
        [_pad2d(uz.T, n_pad, n_pad), _pad2d(ui.T, n_pad, n_pad)], axis=1)

    w_act = jnp.concatenate(
        [_pad2d(wz.T, n_a_pad, n_pad),
         _pad2d(wi.T, n_a_pad, n_pad),
         _pad2d(wa.T, n_a_pad, n_pad)], axis=1)

    def bias_row(b):
        b = jnp.asarray(b, jnp.float32)
        if b.size == 1:
            row = jnp.broadcast_to(b.reshape(1, 1), (1, n_state))
        else:                       # per-unit biases of shape (n_state, 1)
            row = b.reshape(1, n_state)
        return _pad2d(row, 1, n_pad)

    bias = jnp.concatenate(
        [bias_row(bz), bias_row(bi), jnp.zeros((1, n_pad), jnp.float32)],
        axis=1)

    return w_state, w_act, bias, n_pad, n_a_pad


# ----------------------------------------------------------------------------
# Wrappers.
# ----------------------------------------------------------------------------
def cfn_rollout(params, state, actions, *, t_blk=None):
    """Run T recurrent CFN steps in ONE pallas_call.

    state   : (n_state, 1)       initial state (PyTorch column-vector form)
    actions : (T, n_action, 1)   per-step actions
    returns : (T, n_state, 1)    state after each step
    """
    uz, _, wa, *_rest = params
    n_state = uz.shape[0]
    n_action = wa.shape[1]
    T = actions.shape[0]

    w_state, w_act, bias, n_pad, n_a_pad = pack_params(params)

    if t_blk is None:
        t_blk = min(256, _round_up(T, _SUBLANE))
    t_blk = _round_up(t_blk, _SUBLANE)
    t_pad = _round_up(T, t_blk)
    num_chunks = t_pad // t_blk

    s0 = _pad2d(jnp.asarray(state, jnp.float32).reshape(1, n_state), 1, n_pad)
    a = jnp.asarray(actions, jnp.float32).reshape(T, n_action)
    a = jnp.pad(a, ((0, t_pad - T), (0, n_a_pad - n_action)))

    flops_per_step = (2 * n_pad * 2 * n_pad          # recurrent matmul
                      + 2 * n_a_pad * 3 * n_pad      # action matmul (amortized)
                      + 8 * n_pad)                   # elementwise combine
    cost = pl.CostEstimate(
        flops=t_pad * flops_per_step,
        transcendentals=t_pad * 4 * n_pad,
        bytes_accessed=4 * (w_state.size + w_act.size + bias.size
                            + s0.size + a.size + t_pad * n_pad),
    )

    out = pl.pallas_call(
        cfn_chunk_kernel,
        out_shape=jax.ShapeDtypeStruct((t_pad, n_pad), jnp.float32),
        grid_spec=pltpu.PrefetchScalarGridSpec(
            num_scalar_prefetch=0,
            grid=(num_chunks,),
            in_specs=[
                # Resident weights / bias / initial state (constant index_map).
                pl.BlockSpec((n_pad, 2 * n_pad), lambda c: (0, 0)),
                pl.BlockSpec((n_a_pad, 3 * n_pad), lambda c: (0, 0)),
                pl.BlockSpec((1, 3 * n_pad), lambda c: (0, 0)),
                pl.BlockSpec((1, n_pad), lambda c: (0, 0)),
                # Per-chunk action slab.
                pl.BlockSpec((t_blk, n_a_pad), lambda c: (c, 0)),
            ],
            out_specs=pl.BlockSpec((t_blk, n_pad), lambda c: (c, 0)),
            scratch_shapes=[
                pltpu.VMEM((1, n_pad), jnp.float32),          # carried state
                pltpu.VMEM((t_blk, 3 * n_pad), jnp.float32),  # action precompute
            ],
        ),
        compiler_params=pltpu.CompilerParams(
            # Recurrence across chunks -> must stay sequential.
            dimension_semantics=("arbitrary",),
        ),
        cost_estimate=cost,
    )(w_state, w_act, bias, s0, a)

    states = out[:T, :n_state]                     # strip time & lane padding
    return states[:, :, None]                      # (T, n_state, 1)


def cfn_forward(params, state, action):
    """Single step, matching the PyTorch module's forward signature/shapes."""
    actions = action[None]                          # (1, n_action, 1)
    return cfn_rollout(params, state, actions)[0]   # (n_state, 1)


# ----------------------------------------------------------------------------
# Reference / init helpers.
# ----------------------------------------------------------------------------
def init_params(key, n_state, n_action, std=0.35):
    ks = jax.random.split(key, 7)
    normal = lambda k, shape: (std * jax.random.normal(k, shape)).astype(jnp.float32)
    uz = normal(ks[0], (n_state, n_state))
    ui = normal(ks[1], (n_state, n_state))
    wa = normal(ks[2], (n_state, n_action))
    wi = normal(ks[3], (n_state, n_action))
    wz = normal(ks[4], (n_state, n_action))
    bz = normal(ks[5], (1, 1))
    bi = normal(ks[6], (1, 1))
    return (uz, ui, wa, wi, wz, bz, bi)


def init_state(n_state):
    return jnp.zeros((n_state, 1), dtype=jnp.float32)


def cfn_reference(params, state, action):
    """Pure-JAX reference mirroring the PyTorch forward (column-vector math)."""
    uz, ui, wa, wi, wz, bz, bi = params
    zt = jnp.tanh(uz @ state + wz @ action + bz)
    it = jnp.tanh(ui @ state + wi @ action + bi)
    return zt * jnp.tanh(state) + it * jnp.tanh(wa @ action)


if __name__ == "__main__":
    n_state, n_action = 10, 10
    key = jax.random.PRNGKey(0)
    pkey, akey = jax.random.split(key)

    params = init_params(pkey, n_state, n_action)
    state0 = init_state(n_state)

    # --- single step (exactly the PyTorch module's forward) -----------------
    T1 = 8
    actions1 = jax.random.normal(akey, (T1, n_action, 1), dtype=jnp.float32)
    next_state = jax.block_until_ready(cfn_forward(params, state0, actions1[0]))
    ref1 = cfn_reference(params, state0, actions1[0])
    assert next_state.shape == (n_state, 1)
    assert jnp.allclose(next_state, ref1, atol=1e-4, rtol=1e-4)

    # --- multi-step rollout spanning several time-chunks ---------------------
    T2 = 20
    actions2 = jax.random.normal(jax.random.fold_in(akey, 1),
                                 (T2, n_action, 1), dtype=jnp.float32)
    states = jax.block_until_ready(
        cfn_rollout(params, state0, actions2, t_blk=8))   # 3 chunks of 8
    assert states.shape == (T2, n_state, 1)
    s = state0
    for t in range(T2):
        s = cfn_reference(params, s, actions2[t])
        assert jnp.allclose(states[t], s, atol=1e-4, rtol=1e-4), \
            f"mismatch at step {t}"

    # --- default chunking path (single chunk covering the whole rollout) ----
    states_default = jax.block_until_ready(cfn_rollout(params, state0, actions2))
    assert jnp.allclose(states_default, states, atol=1e-4, rtol=1e-4)

    print("KERNEL_OK")
</pallas_src>

<mosaic_0001>
module attributes {stable_mosaic.version = 11 : i64} {
  func.func @cfn_chunk_kernel(%arg0: i32, %arg1: memref<128x256xf32, #tpu.memory_space<vmem>>, %arg2: memref<128x384xf32, #tpu.memory_space<vmem>>, %arg3: memref<1x384xf32, #tpu.memory_space<vmem>>, %arg4: memref<1x128xf32, #tpu.memory_space<vmem>>, %arg5: memref<8x128xf32, #tpu.memory_space<vmem>>, %arg6: memref<8x128xf32, #tpu.memory_space<vmem>>, %arg7: memref<1x128xf32, #tpu.memory_space<vmem>>, %arg8: memref<8x384xf32, #tpu.memory_space<vmem>>) attributes {dimension_semantics = [#tpu.dimension_semantics<arbitrary>], iteration_bounds = array<i64: 1>, scalar_prefetch = 0 : i64, scratch_operands = 2 : i64, tpu.core_type = #tpu.core_type<tc>, window_params = [{pipeline_mode = #tpu.pipeline_mode<synchronous>, transform_indices = @transform_0, window_bounds = array<i64: 128, 256>}, {pipeline_mode = #tpu.pipeline_mode<synchronous>, transform_indices = @transform_1, window_bounds = array<i64: 128, 384>}, {pipeline_mode = #tpu.pipeline_mode<synchronous>, transform_indices = @transform_2, window_bounds = array<i64: 1, 384>}, {pipeline_mode = #tpu.pipeline_mode<synchronous>, transform_indices = @transform_3, window_bounds = array<i64: 1, 128>}, {transform_indices = @transform_4, window_bounds = array<i64: 8, 128>}, {transform_indices = @transform_5, window_bounds = array<i64: 8, 128>}]} {
    %c0_i32 = arith.constant 0 : i32
    %0 = arith.cmpi eq, %arg0, %c0_i32 : i32
    %1 = arith.extui %0 : i1 to i32
    %c0_i32_0 = arith.constant 0 : i32
    %2 = arith.cmpi ne, %1, %c0_i32_0 : i32
    scf.if %2 {
      %c0_15 = arith.constant 0 : index
      %c0_16 = arith.constant 0 : index
      %18 = vector.load %arg4[%c0_15, %c0_16] : memref<1x128xf32, #tpu.memory_space<vmem>>, vector<1x128xf32>
      %c0_17 = arith.constant 0 : index
      %c0_18 = arith.constant 0 : index
      %19 = vector.load %arg7[%c0_17, %c0_18] : memref<1x128xf32, #tpu.memory_space<vmem>>, vector<1x128xf32>
      tpu.vector_store %arg7[%c0_17, %c0_18], %18 {strides = array<i32>} : memref<1x128xf32, #tpu.memory_space<vmem>>, vector<1x128xf32>,
    } else {
    }
    %c0 = arith.constant 0 : index
    %c0_1 = arith.constant 0 : index
    %3 = vector.load %arg5[%c0, %c0_1] : memref<8x128xf32, #tpu.memory_space<vmem>>, vector<8x128xf32>
    %c0_2 = arith.constant 0 : index
    %c0_3 = arith.constant 0 : index
    %4 = vector.load %arg2[%c0_2, %c0_3] : memref<128x384xf32, #tpu.memory_space<vmem>>, vector<128x384xf32>
    %cst = arith.constant dense<0.000000e+00> : vector<8x384xf32>
    %5 = tpu.matmul %3, %4, %cst {dimension_numbers = #tpu.dot_dimension_numbers<[1], [0], [0], [1], [0, 0, 1, 1], [], []>} : vector<8x128xf32>, vector<128x384xf32>, vector<8x384xf32> -> vector<8x384xf32>
    %c0_4 = arith.constant 0 : index
    %c0_5 = arith.constant 0 : index
    %6 = vector.load %arg3[%c0_4, %c0_5] : memref<1x384xf32, #tpu.memory_space<vmem>>, vector<1x384xf32>
    %7 = vector.broadcast %6 : vector<1x384xf32> to vector<8x384xf32>
    %8 = arith.addf %5, %7 : vector<8x384xf32>
    %9 = vector.extract_strided_slice %8 {offsets = [0, 0], sizes = [8, 256], strides = [1, 1]} : vector<8x384xf32> to vector<8x256xf32>
    %c0_6 = arith.constant 0 : index
    %c0_7 = arith.constant 0 : index
    %10 = vector.load %arg8[%c0_6, %c0_7] : memref<8x384xf32, #tpu.memory_space<vmem>>, vector<8x256xf32>
    tpu.vector_store %arg8[%c0_6, %c0_7], %9 {strides = array<i32>} : memref<8x384xf32, #tpu.memory_space<vmem>>, vector<8x256xf32>,
    %11 = vector.extract_strided_slice %8 {offsets = [0, 256], sizes = [8, 128], strides = [1, 1]} : vector<8x384xf32> to vector<8x128xf32>
    %12 = math.tanh %11 : vector<8x128xf32>
    %c0_8 = arith.constant 0 : index
    %c256 = arith.constant 256 : index
    %13 = vector.load %arg8[%c0_8, %c256] : memref<8x384xf32, #tpu.memory_space<vmem>>, vector<8x128xf32>
    tpu.vector_store %arg8[%c0_8, %c256], %12 {strides = array<i32>} : memref<8x384xf32, #tpu.memory_space<vmem>>, vector<8x128xf32>,
    %c0_9 = arith.constant 0 : index
    %c0_10 = arith.constant 0 : index
    %14 = vector.load %arg7[%c0_9, %c0_10] : memref<1x128xf32, #tpu.memory_space<vmem>>, vector<1x128xf32>
    %c0_i32_11 = arith.constant 0 : i32
    %c8_i32 = arith.constant 8 : i32
    %15 = arith.addi %c0_i32_11, %c8_i32 : i32
    %c1_i32 = arith.constant 1 : i32
    %16 = scf.for %arg9 = %c0_i32_11 to %15 step %c1_i32 iter_args(%arg10 = %14) -> (vector<1x128xf32>)  : i32 {
      %c0_15 = arith.constant 0 : index
      %c0_16 = arith.constant 0 : index
      %18 = vector.load %arg1[%c0_15, %c0_16] : memref<128x256xf32, #tpu.memory_space<vmem>>, vector<128x256xf32>
      %cst_17 = arith.constant dense<0.000000e+00> : vector<1x256xf32>
      %19 = tpu.matmul %arg10, %18, %cst_17 {dimension_numbers = #tpu.dot_dimension_numbers<[1], [0], [0], [1], [0, 0, 1, 1], [], []>} : vector<1x128xf32>, vector<128x256xf32>, vector<1x256xf32> -> vector<1x256xf32>
      %20 = arith.index_cast %arg9 : i32 to index
      %c0_18 = arith.constant 0 : index
      %21 = vector.load %arg8[%20, %c0_18] : memref<8x384xf32, #tpu.memory_space<vmem>>, vector<1x384xf32>
      %22 = vector.extract_strided_slice %19 {offsets = [0, 0], sizes = [1, 128], strides = [1, 1]} : vector<1x256xf32> to vector<1x128xf32>
      %23 = vector.extract_strided_slice %21 {offsets = [0, 0], sizes = [1, 128], strides = [1, 1]} : vector<1x384xf32> to vector<1x128xf32>
      %24 = arith.addf %22, %23 : vector<1x128xf32>
      %25 = math.tanh %24 : vector<1x128xf32>
      %26 = vector.extract_strided_slice %19 {offsets = [0, 128], sizes = [1, 128], strides = [1, 1]} : vector<1x256xf32> to vector<1x128xf32>
      %27 = vector.extract_strided_slice %21 {offsets = [0, 128], sizes = [1, 128], strides = [1, 1]} : vector<1x384xf32> to vector<1x128xf32>
      %28 = arith.addf %26, %27 : vector<1x128xf32>
      %29 = math.tanh %28 : vector<1x128xf32>
      %30 = math.tanh %arg10 : vector<1x128xf32>
      %31 = arith.mulf %25, %30 : vector<1x128xf32>
      %32 = vector.extract_strided_slice %21 {offsets = [0, 256], sizes = [1, 128], strides = [1, 1]} : vector<1x384xf32> to vector<1x128xf32>
      %33 = arith.mulf %29, %32 : vector<1x128xf32>
      %34 = arith.addf %31, %33 : vector<1x128xf32>
      %35 = arith.index_cast %arg9 : i32 to index
      %c0_19 = arith.constant 0 : index
      %36 = vector.load %arg6[%35, %c0_19] : memref<8x128xf32, #tpu.memory_space<vmem>>, vector<1x128xf32>
      tpu.vector_store %arg6[%35, %c0_19], %34 {strides = array<i32>} : memref<8x128xf32, #tpu.memory_space<vmem>>, vector<1x128xf32>,
      scf.yield %34 : vector<1x128xf32>
    }
    %c8_i32_12 = arith.constant 8 : i32
    %c0_13 = arith.constant 0 : index
    %c0_14 = arith.constant 0 : index
    %17 = vector.load %arg7[%c0_13, %c0_14] : memref<1x128xf32, #tpu.memory_space<vmem>>, vector<1x128xf32>
    tpu.vector_store %arg7[%c0_13, %c0_14], %16 {strides = array<i32>} : memref<1x128xf32, #tpu.memory_space<vmem>>, vector<1x128xf32>,
    return
  }
  func.func @transform_0(%arg0: i32) -> (i32, i32) {
    %c0_i32 = arith.constant 0 : i32
    %c0_i32_0 = arith.constant 0 : i32
    %c0_i32_1 = arith.constant 0 : i32
    return %c0_i32, %c0_i32_0 : i32, i32
  }
  func.func @transform_1(%arg0: i32) -> (i32, i32) {
    %c0_i32 = arith.constant 0 : i32
    %c0_i32_0 = arith.constant 0 : i32
    %c0_i32_1 = arith.constant 0 : i32
    return %c0_i32, %c0_i32_0 : i32, i32
  }
  func.func @transform_2(%arg0: i32) -> (i32, i32) {
    %c0_i32 = arith.constant 0 : i32
    %c0_i32_0 = arith.constant 0 : i32
    %c0_i32_1 = arith.constant 0 : i32
    return %c0_i32, %c0_i32_0 : i32, i32
  }
  func.func @transform_3(%arg0: i32) -> (i32, i32) {
    %c0_i32 = arith.constant 0 : i32
    %c0_i32_0 = arith.constant 0 : i32
    %c0_i32_1 = arith.constant 0 : i32
    return %c0_i32, %c0_i32_0 : i32, i32
  }
  func.func @transform_4(%arg0: i32) -> (i32, i32) {
    %c0_i32 = arith.constant 0 : i32
    %c0_i32_0 = arith.constant 0 : i32
    return %arg0, %c0_i32 : i32, i32
  }
  func.func @transform_5(%arg0: i32) -> (i32, i32) {
    %c0_i32 = arith.constant 0 : i32
    %c0_i32_0 = arith.constant 0 : i32
    return %arg0, %c0_i32 : i32, i32
  }
}

</mosaic_0001>

<llo_original>
// kernel: tpu_custom_call.1
$region0: #{tpu_custom_call.1}
  #allocation0 [shape = 'u32[]', space=smem, size = 0x4, offset = 0x4, fixed_abs, tag = 'smem constant byte address 0x4 - core index']
  #allocation1 [shape = 'u32[144,128]{1,0:T(1,128)}', space=vmem, size = 0x12000, scoped, tag = 'internal scratch']
  #allocation2 [shape = 'f32[1,128]{1,0:T(1,128)}', space=vmem, size = 0x200, scoped, tag = 'scratch operand']
  #allocation3 [shape = 'f32[8,384]{1,0:T(8,128)}', space=vmem, size = 0x3000, scoped, tag = 'scratch operand']
  %s0 = inlined_call_operand.hbm [shape: f32[128,256], index: 0, kind: input, shape index: {}]
  %s1 = inlined_call_operand.hbm [shape: f32[128,384], index: 1, kind: input, shape index: {}]
  %s2 = inlined_call_operand.vmem [shape: f32[1,384], index: 2, kind: input, shape index: {}]
  %s3 = inlined_call_operand.vmem [shape: f32[1,128], index: 3, kind: input, shape index: {}]
  %s4 = inlined_call_operand.vmem [shape: f32[8,128], index: 4, kind: input, shape index: {}]
  %s5 = inlined_call_operand.hbm [shape: f32[8,128], index: 5, kind: output, shape index: {}]
  %s6 = sld [smem:[#allocation0]]
  $region49: #{tpu_custom_call.1} parent=0
    _
  %s8 = ssub.s32 1, %s6
  %s9 = scalar_select 0, %s8, %s6
  $region1: #{tpu_custom_call.1} parent=0
    #allocation4 [shape = 'u8[131072]{0}', space=vmem, size = 0x20000, scoped, tag = 'input window, operand 0, single buffered']
    #allocation5 [shape = 's32[1]{0}', space=sflag, size = 0x4, scoped, tag = 'scoped memory for tpu_custom_call.1']
    #allocation6 [shape = 's32[1]{0}', space=sflag, size = 0x4, scoped, tag = 'scoped memory for tpu_custom_call.1']
    #allocation7 [shape = 'u8[196608]{0}', space=vmem, size = 0x30000, scoped, tag = 'input window, operand 1, single buffered']
    #allocation8 [shape = 's32[1]{0}', space=sflag, size = 0x4, scoped, tag = 'scoped memory for tpu_custom_call.1']
    #allocation9 [shape = 'u8[4096]{0}', space=vmem, size = 0x1000, scoped, tag = 'output window, operand 0, single buffered']
    %10 = vsyncpa [#allocation5], 0
    %11 = vsyncpa [#allocation8], 0
    %12 = vsyncpa [#allocation6], 0
    // Predicated region
    $region2: #{tpu_custom_call.1} parent=1 // pred_check
      _
    $region3: #{tpu_custom_call.1} parent=1 // pred_check_branch
      %14 = sbr.rel (0) target = $region5
    $region4: #{tpu_custom_call.1} parent=1 // pred_region
      %s16 = ssub.s32 4096, 4096
      %17 = vsyncadd [#allocation5], %s16
      %s18 = sshll.u32 [#allocation4], 4
      %s19 = int_to_ptr.vmem [resolvable:$true] %s18
      %24 = dma.hbm_to_vmem [thread:$0]  %s0, 4096, %s19, [#allocation5], 256, 256, 16
    $region5: #{tpu_custom_call.1} parent=1 // pred_fallthru
      _
    // Predicated region
    $region6: #{tpu_custom_call.1} parent=1 // pred_check
      _
    $region7: #{tpu_custom_call.1} parent=1 // pred_check_branch
      %26 = sbr.rel (0) target = $region9
    $region8: #{tpu_custom_call.1} parent=1 // pred_region
      %s28 = ssub.s32 6144, 6144
      %29 = vsyncadd [#allocation8], %s28
      %s30 = sshll.u32 [#allocation7], 4
      %s31 = int_to_ptr.vmem [resolvable:$true] %s30
      %36 = dma.hbm_to_vmem [thread:$0]  %s1, 6144, %s31, [#allocation8], 384, 384, 24
    $region9: #{tpu_custom_call.1} parent=1 // pred_fallthru
      _
    // Predicated region
    $region10: #{tpu_custom_call.1} parent=1 // pred_check
      _
    $region11: #{tpu_custom_call.1} parent=1 // pred_check_branch
      %38 = sbr.rel (0) target = $region13
    $region12: #{tpu_custom_call.1} parent=1 // pred_region
      _
    $region13: #{tpu_custom_call.1} parent=1 // pred_fallthru
      _
    // Predicated region
    $region14: #{tpu_custom_call.1} parent=1 // pred_check
      _
    $region15: #{tpu_custom_call.1} parent=1 // pred_check_branch
      %40 = sbr.rel (0) target = $region17
    $region16: #{tpu_custom_call.1} parent=1 // pred_region
      _
    $region17: #{tpu_custom_call.1} parent=1 // pred_fallthru
      _
    // Predicated region
    $region18: #{tpu_custom_call.1} parent=1 // pred_check
      _
    $region19: #{tpu_custom_call.1} parent=1 // pred_check_branch
      %42 = sbr.rel (0) target = $region21
    $region20: #{tpu_custom_call.1} parent=1 // pred_region
      _
    $region21: #{tpu_custom_call.1} parent=1 // pred_fallthru
      _
    // Predicated region
    $region22: #{tpu_custom_call.1} parent=1 // pred_check
      _
    $region23: #{tpu_custom_call.1} parent=1 // pred_check_branch
      %44 = sbr.rel (0) target = $region25
    $region24: #{tpu_custom_call.1} parent=1 // pred_region
      %45 = dma.done [#allocation5], 4096
    $region25: #{tpu_custom_call.1} parent=1 // pred_fallthru
      _
    // Predicated region
    $region26: #{tpu_custom_call.1} parent=1 // pred_check
      _
    $region27: #{tpu_custom_call.1} parent=1 // pred_check_branch
      %47 = sbr.rel (0) target = $region29
    $region28: #{tpu_custom_call.1} parent=1 // pred_region
      %48 = dma.done [#allocation8], 6144
    $region29: #{tpu_custom_call.1} parent=1 // pred_fallthru
      _
    %p49 = scmp.eq.s32.totalorder 0, 0
    // Predicated region
    $region30: #{tpu_custom_call.1} parent=1 // pred_check
      %p50 = pneg %p49
    $region31: #{tpu_custom_call.1} parent=1 // pred_check_branch
      %52 = sbr.rel (%p50) target = $region33
    $region32: #{tpu_custom_call.1} parent=1 // pred_region
      %v53 = vld [vmem:[%s3] sm:$0x1]
      %54 = vst [vmem:[#allocation2] sm:$0x1] %v53
    $region33: #{tpu_custom_call.1} parent=1 // pred_fallthru
      _
    %v55 = vld [vmem:[%s4] sm:$0xff]
    %v56 = vld [vmem:[#allocation7] sm:$0xff]
    %v57 = vld [vmem:[#allocation7 + $0x8] sm:$0xff]
    %v58 = vld [vmem:[#allocation7 + $0x10] sm:$0xff]
    %v59 = vld [vmem:[#allocation7 + $0x18] sm:$0xff]
    %v60 = vld [vmem:[#allocation7 + $0x20] sm:$0xff]
    %v61 = vld [vmem:[#allocation7 + $0x28] sm:$0xff]
    %v62 = vld [vmem:[#allocation7 + $0x30] sm:$0xff]
    %v63 = vld [vmem:[#allocation7 + $0x38] sm:$0xff]
    %v64 = vld [vmem:[#allocation7 + $0x40] sm:$0xff]
    %v65 = vld [vmem:[#allocation7 + $0x48] sm:$0xff]
    %v66 = vld [vmem:[#allocation7 + $0x50] sm:$0xff]
    %v67 = vld [vmem:[#allocation7 + $0x58] sm:$0xff]
    %v68 = vld [vmem:[#allocation7 + $0x60] sm:$0xff]
    %v69 = vld [vmem:[#allocation7 + $0x68] sm:$0xff]
    %v70 = vld [vmem:[#allocation7 + $0x70] sm:$0xff]
    %v71 = vld [vmem:[#allocation7 + $0x78] sm:$0xff]
    %v72 = vld [vmem:[#allocation7 + $0x80] sm:$0xff]
    %v73 = vld [vmem:[#allocation7 + $0x88] sm:$0xff]
    %v74 = vld [vmem:[#allocation7 + $0x90] sm:$0xff]
    %v75 = vld [vmem:[#allocation7 + $0x98] sm:$0xff]
    %v76 = vld [vmem:[#allocation7 + $0xa0] sm:$0xff]
    %v77 = vld [vmem:[#allocation7 + $0xa8] sm:$0xff]
    %v78 = vld [vmem:[#allocation7 + $0xb0] sm:$0xff]
    %v79 = vld [vmem:[#allocation7 + $0xb8] sm:$0xff]
    %v80 = vld [vmem:[#allocation7 + $0xc0] sm:$0xff]
    %v81 = vld [vmem:[#allocation7 + $0xc8] sm:$0xff]
    %v82 = vld [vmem:[#allocation7 + $0xd0] sm:$0xff]
    %v83 = vld [vmem:[#allocation7 + $0xd8] sm:$0xff]
    %v84 = vld [vmem:[#allocation7 + $0xe0] sm:$0xff]
    %v85 = vld [vmem:[#allocation7 + $0xe8] sm:$0xff]
    %v86 = vld [vmem:[#allocation7 + $0xf0] sm:$0xff]
    %v87 = vld [vmem:[#allocation7 + $0xf8] sm:$0xff]
    %v88 = vld [vmem:[#allocation7 + $0x100] sm:$0xff]
    %v89 = vld [vmem:[#allocation7 + $0x108] sm:$0xff]
    %v90 = vld [vmem:[#allocation7 + $0x110] sm:$0xff]
    %v91 = vld [vmem:[#allocation7 + $0x118] sm:$0xff]
    %v92 = vld [vmem:[#allocation7 + $0x120] sm:$0xff]
    %v93 = vld [vmem:[#allocation7 + $0x128] sm:$0xff]
    %v94 = vld [vmem:[#allocation7 + $0x130] sm:$0xff]
    %v95 = vld [vmem:[#allocation7 + $0x138] sm:$0xff]
    %v96 = vld [vmem:[#allocation7 + $0x140] sm:$0xff]
    %v97 = vld [vmem:[#allocation7 + $0x148] sm:$0xff]
    %v98 = vld [vmem:[#allocation7 + $0x150] sm:$0xff]
    %v99 = vld [vmem:[#allocation7 + $0x158] sm:$0xff]
    %v100 = vld [vmem:[#allocation7 + $0x160] sm:$0xff]
    %v101 = vld [vmem:[#allocation7 + $0x168] sm:$0xff]
    %v102 = vld [vmem:[#allocation7 + $0x170] sm:$0xff]
    %v103 = vld [vmem:[#allocation7 + $0x178] sm:$0xff]
    %v104 = vld [vmem:[%s2] sm:$0x7]
    %v106 = vlaneseq
    %v107 = vshrl.u32 %v106, 7
    %v108 = vsub.s32 0, %v107
    %v109 = vrot.slane %v104, %v108
    %v110 = vlaneseq
    %v111 = vshrl.u32 %v110, 7
    %v112 = vsub.s32 1, %v111
    %v113 = vrot.slane %v104, %v112
    %v114 = vlaneseq
    %v115 = vshrl.u32 %v114, 7
    %v116 = vsub.s32 2, %v115
    %v117 = vrot.slane %v104, %v116
    %121 = vmatprep.subr.mxu0 %v57
    %122 = vmatpush1.msra.mxu0 %v56
    %123 = vmatprep.subr.mxu0 %v60
    %124 = vmatpush1.msra.mxu0 %v59
    %125 = vmatprep.subr.mxu0 %v63
    %126 = vmatpush1.msra.mxu0 %v62
    %127 = vmatprep.subr.mxu0 %v66
    %128 = vmatpush1.msra.mxu0 %v65
    %129 = vmatprep.subr.mxu0 %v69
    %130 = vmatpush1.msra.mxu0 %v68
    %131 = vmatprep.subr.mxu0 %v72
    %132 = vmatpush1.msra.mxu0 %v71
    %133 = vmatprep.subr.mxu0 %v75
    %134 = vmatpush1.msra.mxu0 %v74
    %135 = vmatprep.subr.mxu0 %v78
    %136 = vmatpush1.msra.mxu0 %v77
    %137 = vmatprep.subr.mxu0 %v81
    %138 = vmatpush1.msra.mxu0 %v80
    %139 = vmatprep.subr.mxu0 %v84
    %140 = vmatpush1.msra.mxu0 %v83
    %141 = vmatprep.subr.mxu0 %v87
    %142 = vmatpush1.msra.mxu0 %v86
    %143 = vmatprep.subr.mxu0 %v90
    %144 = vmatpush1.msra.mxu0 %v89
    %145 = vmatprep.subr.mxu0 %v93
    %146 = vmatpush1.msra.mxu0 %v92
    %147 = vmatprep.subr.mxu0 %v96
    %148 = vmatpush1.msra.mxu0 %v95
    %149 = vmatprep.subr.mxu0 %v99
    %150 = vmatpush1.msra.mxu0 %v98
    %151 = vmatprep.subr.mxu0 %v102
    %152 = vmatpush1.msra.mxu0 %v101
    %153 = vmatprep.subr.mxu0 0.0
    %154 = vmatpush1.msra.mxu0 0.0
    %155 = vmatprep.subr.mxu0 0.0
    %156 = vmatpush1.msra.mxu0 0.0
    %157 = vmatprep.subr.mxu0 0.0
    %158 = vmatpush1.msra.mxu0 0.0
    %159 = vmatprep.subr.mxu0 0.0
    %160 = vmatpush1.msra.mxu0 0.0
    %161 = vmatprep.subr.mxu0 0.0
    %162 = vmatpush1.msra.mxu0 0.0
    %163 = vmatprep.subr.mxu0 0.0
    %164 = vmatpush1.msra.mxu0 0.0
    %165 = vmatprep.subr.mxu0 0.0
    %166 = vmatpush1.msra.mxu0 0.0
    %167 = vmatprep.subr.mxu0 0.0
    %168 = vmatpush1.msra.mxu0 0.0
    %169 = vmatprep.subr.mxu0 0.0
    %170 = vmatpush1.msra.mxu0 0.0
    %171 = vmatprep.subr.mxu0 0.0
    %172 = vmatpush1.msra.mxu0 0.0
    %173 = vmatprep.subr.mxu0 0.0
    %174 = vmatpush1.msra.mxu0 0.0
    %175 = vmatprep.subr.mxu0 0.0
    %176 = vmatpush1.msra.mxu0 0.0
    %177 = vmatprep.subr.mxu0 0.0
    %178 = vmatpush1.msra.mxu0 0.0
    %179 = vmatprep.subr.mxu0 0.0
    %180 = vmatpush1.msra.mxu0 0.0
    %181 = vmatprep.subr.mxu0 0.0
    %182 = vmatpush1.msra.mxu0 0.0
    %183 = vmatprep.subr.mxu0 0.0
    %184 = vmatpush1.msra.mxu0 0.0
    %185 = vmatprep.mubr.f32.mxu0 0.0
    %186 = vmatmul.mubr.f32.gmra.mrb[0].mxu0 %v55
    %v187 = vpop.f32.mrb[0].mxu0
    %v188 = vadd.f32 %v109, %v187
    %v189 = vpop.f32.mrb[0].mxu0
    %v190 = vadd.f32 %v113, %v189
    %191 = vdwg.mxu0
    %192 = vmatprep.subr.mxu0 0.0
    %193 = vmatpush1.msra.mxu0 %v58
    %194 = vmatprep.subr.mxu0 0.0
    %195 = vmatpush1.msra.mxu0 %v61
    %196 = vmatprep.subr.mxu0 0.0
    %197 = vmatpush1.msra.mxu0 %v64
    %198 = vmatprep.subr.mxu0 0.0
    %199 = vmatpush1.msra.mxu0 %v67
    %200 = vmatprep.subr.mxu0 0.0
    %201 = vmatpush1.msra.mxu0 %v70
    %202 = vmatprep.subr.mxu0 0.0
    %203 = vmatpush1.msra.mxu0 %v73
    %204 = vmatprep.subr.mxu0 0.0
    %205 = vmatpush1.msra.mxu0 %v76
    %206 = vmatprep.subr.mxu0 0.0
    %207 = vmatpush1.msra.mxu0 %v79
    %208 = vmatprep.subr.mxu0 0.0
    %209 = vmatpush1.msra.mxu0 %v82
    %210 = vmatprep.subr.mxu0 0.0
    %211 = vmatpush1.msra.mxu0 %v85
    %212 = vmatprep.subr.mxu0 0.0
    %213 = vmatpush1.msra.mxu0 %v88
    %214 = vmatprep.subr.mxu0 0.0
    %215 = vmatpush1.msra.mxu0 %v91
    %216 = vmatprep.subr.mxu0 0.0
    %217 = vmatpush1.msra.mxu0 %v94
    %218 = vmatprep.subr.mxu0 0.0
    %219 = vmatpush1.msra.mxu0 %v97
    %220 = vmatprep.subr.mxu0 0.0
    %221 = vmatpush1.msra.mxu0 %v100
    %222 = vmatprep.subr.mxu0 0.0
    %223 = vmatpush1.msra.mxu0 %v103
    %224 = vmatprep.subr.mxu0 0.0
    %225 = vmatpush1.msra.mxu0 0.0
    %226 = vmatprep.subr.mxu0 0.0
    %227 = vmatpush1.msra.mxu0 0.0
    %228 = vmatprep.subr.mxu0 0.0
    %229 = vmatpush1.msra.mxu0 0.0
    %230 = vmatprep.subr.mxu0 0.0
    %231 = vmatpush1.msra.mxu0 0.0
    %232 = vmatprep.subr.mxu0 0.0
    %233 = vmatpush1.msra.mxu0 0.0
    %234 = vmatprep.subr.mxu0 0.0
    %235 = vmatpush1.msra.mxu0 0.0
    %236 = vmatprep.subr.mxu0 0.0
    %237 = vmatpush1.msra.mxu0 0.0
    %238 = vmatprep.subr.mxu0 0.0
    %239 = vmatpush1.msra.mxu0 0.0
    %240 = vmatprep.subr.mxu0 0.0
    %241 = vmatpush1.msra.mxu0 0.0
    %242 = vmatprep.subr.mxu0 0.0
    %243 = vmatpush1.msra.mxu0 0.0
    %244 = vmatprep.subr.mxu0 0.0
    %245 = vmatpush1.msra.mxu0 0.0
    %246 = vmatprep.subr.mxu0 0.0
    %247 = vmatpush1.msra.mxu0 0.0
    %248 = vmatprep.subr.mxu0 0.0
    %249 = vmatpush1.msra.mxu0 0.0
    %250 = vmatprep.subr.mxu0 0.0
    %251 = vmatpush1.msra.mxu0 0.0
    %252 = vmatprep.subr.mxu0 0.0
    %253 = vmatpush1.msra.mxu0 0.0
    %254 = vmatprep.subr.mxu0 0.0
    %255 = vmatpush1.msra.mxu0 0.0
    %256 = vmatprep.mubr.f32.mxu0 0.0
    %257 = vmatmul.mubr.f32.gmra.mrb[0].mxu0 %v55
    %v258 = vpop.f32.mrb[0].mxu0
    %v259 = vadd.f32 %v117, %v258
    %v260 = vpop.f32.mrb[0].mxu0
    %261 = vdwg.mxu0
    %262 = vst [vmem:[#allocation3] sm:$0xff] %v188
    %263 = vst [vmem:[#allocation3 + $0x8] sm:$0xff] %v190
    %v264 = vtanh.pop %v259
    %265 = vst [vmem:[#allocation3 + $0x10] sm:$0xff] %v264
    %v266 = vld [vmem:[#allocation2] sm:$0x1]
    loop: start=0, step=1, limit=8
    $region34: #{tpu_custom_call.1} parent=1 // loop_pre_header
      _
    $region35: #{tpu_custom_call.1} parent=1 // loop_header
      %s268 = sphi 0, %s272
      %p269 = scmp.ge.s32.totalorder %s268, 8
      %v273 = vphi %v266, %v404
    $region36: #{tpu_custom_call.1} parent=1 // loop_header_branch
      %271 = sbr.rel (%p269) target = $region40
    $region37: #{tpu_custom_call.1} parent=1 // loop_body
      %v274 = vld [vmem:[#allocation4] sm:$0xff]
      %v275 = vld [vmem:[#allocation4 + $0x8] sm:$0xff]
      %v276 = vld [vmem:[#allocation4 + $0x10] sm:$0xff]
      %v277 = vld [vmem:[#allocation4 + $0x18] sm:$0xff]
      %v278 = vld [vmem:[#allocation4 + $0x20] sm:$0xff]
      %v279 = vld [vmem:[#allocation4 + $0x28] sm:$0xff]
      %v280 = vld [vmem:[#allocation4 + $0x30] sm:$0xff]
      %v281 = vld [vmem:[#allocation4 + $0x38] sm:$0xff]
      %v282 = vld [vmem:[#allocation4 + $0x40] sm:$0xff]
      %v283 = vld [vmem:[#allocation4 + $0x48] sm:$0xff]
      %v284 = vld [vmem:[#allocation4 + $0x50] sm:$0xff]
      %v285 = vld [vmem:[#allocation4 + $0x58] sm:$0xff]
      %v286 = vld [vmem:[#allocation4 + $0x60] sm:$0xff]
      %v287 = vld [vmem:[#allocation4 + $0x68] sm:$0xff]
      %v288 = vld [vmem:[#allocation4 + $0x70] sm:$0xff]
      %v289 = vld [vmem:[#allocation4 + $0x78] sm:$0xff]
      %v290 = vld [vmem:[#allocation4 + $0x80] sm:$0xff]
      %v291 = vld [vmem:[#allocation4 + $0x88] sm:$0xff]
      %v292 = vld [vmem:[#allocation4 + $0x90] sm:$0xff]
      %v293 = vld [vmem:[#allocation4 + $0x98] sm:$0xff]
      %v294 = vld [vmem:[#allocation4 + $0xa0] sm:$0xff]
      %v295 = vld [vmem:[#allocation4 + $0xa8] sm:$0xff]
      %v296 = vld [vmem:[#allocation4 + $0xb0] sm:$0xff]
      %v297 = vld [vmem:[#allocation4 + $0xb8] sm:$0xff]
      %v298 = vld [vmem:[#allocation4 + $0xc0] sm:$0xff]
      %v299 = vld [vmem:[#allocation4 + $0xc8] sm:$0xff]
      %v300 = vld [vmem:[#allocation4 + $0xd0] sm:$0xff]
      %v301 = vld [vmem:[#allocation4 + $0xd8] sm:$0xff]
      %v302 = vld [vmem:[#allocation4 + $0xe0] sm:$0xff]
      %v303 = vld [vmem:[#allocation4 + $0xe8] sm:$0xff]
      %v304 = vld [vmem:[#allocation4 + $0xf0] sm:$0xff]
      %v305 = vld [vmem:[#allocation4 + $0xf8] sm:$0xff]
      %306 = vmatprep.subr.mxu0 %v275
      %307 = vmatpush1.msra.mxu0 %v274
      %308 = vmatprep.subr.mxu0 %v277
      %309 = vmatpush1.msra.mxu0 %v276
      %310 = vmatprep.subr.mxu0 %v279
      %311 = vmatpush1.msra.mxu0 %v278
      %312 = vmatprep.subr.mxu0 %v281
      %313 = vmatpush1.msra.mxu0 %v280
      %314 = vmatprep.subr.mxu0 %v283
      %315 = vmatpush1.msra.mxu0 %v282
      %316 = vmatprep.subr.mxu0 %v285
      %317 = vmatpush1.msra.mxu0 %v284
      %318 = vmatprep.subr.mxu0 %v287
      %319 = vmatpush1.msra.mxu0 %v286
      %320 = vmatprep.subr.mxu0 %v289
      %321 = vmatpush1.msra.mxu0 %v288
      %322 = vmatprep.subr.mxu0 %v291
      %323 = vmatpush1.msra.mxu0 %v290
      %324 = vmatprep.subr.mxu0 %v293
      %325 = vmatpush1.msra.mxu0 %v292
      %326 = vmatprep.subr.mxu0 %v295
      %327 = vmatpush1.msra.mxu0 %v294
      %328 = vmatprep.subr.mxu0 %v297
      %329 = vmatpush1.msra.mxu0 %v296
      %330 = vmatprep.subr.mxu0 %v299
      %331 = vmatpush1.msra.mxu0 %v298
      %332 = vmatprep.subr.mxu0 %v301
      %333 = vmatpush1.msra.mxu0 %v300
      %334 = vmatprep.subr.mxu0 %v303
      %335 = vmatpush1.msra.mxu0 %v302
      %336 = vmatprep.subr.mxu0 %v305
      %337 = vmatpush1.msra.mxu0 %v304
      %338 = vmatprep.subr.mxu0 0.0
      %339 = vmatpush1.msra.mxu0 0.0
      %340 = vmatprep.subr.mxu0 0.0
      %341 = vmatpush1.msra.mxu0 0.0
      %342 = vmatprep.subr.mxu0 0.0
      %343 = vmatpush1.msra.mxu0 0.0
      %344 = vmatprep.subr.mxu0 0.0
      %345 = vmatpush1.msra.mxu0 0.0
      %346 = vmatprep.subr.mxu0 0.0
      %347 = vmatpush1.msra.mxu0 0.0
      %348 = vmatprep.subr.mxu0 0.0
      %349 = vmatpush1.msra.mxu0 0.0
      %350 = vmatprep.subr.mxu0 0.0
      %351 = vmatpush1.msra.mxu0 0.0
      %352 = vmatprep.subr.mxu0 0.0
      %353 = vmatpush1.msra.mxu0 0.0
      %354 = vmatprep.subr.mxu0 0.0
      %355 = vmatpush1.msra.mxu0 0.0
      %356 = vmatprep.subr.mxu0 0.0
      %357 = vmatpush1.msra.mxu0 0.0
      %358 = vmatprep.subr.mxu0 0.0
      %359 = vmatpush1.msra.mxu0 0.0
      %360 = vmatprep.subr.mxu0 0.0
      %361 = vmatpush1.msra.mxu0 0.0
      %362 = vmatprep.subr.mxu0 0.0
      %363 = vmatpush1.msra.mxu0 0.0
      %364 = vmatprep.subr.mxu0 0.0
      %365 = vmatpush1.msra.mxu0 0.0
      %366 = vmatprep.subr.mxu0 0.0
      %367 = vmatpush1.msra.mxu0 0.0
      %368 = vmatprep.subr.mxu0 0.0
      %369 = vmatpush1.msra.mxu0 0.0
      %370 = vmatprep.mubr.f32.mxu0 0.0
      %371 = vmatmul.mubr.f32.gmra.mrb[0].mxu0 %v273
      %v372 = vpop.f32.mrb[0].mxu0
      %v373 = vadd.f32 0.0, %v372
      %v374 = vpop.f32.mrb[0].mxu0
      %v375 = vadd.f32 0.0, %v374
      %376 = vdwg.mxu0
      %s377 = sshra.s32 %s268, 3
      %s378 = sand.u32 %s268, 7
      %s379 = sshra.s32 %s268, 3
      %s380 = sand.u32 %s268, 7
      %s381 = smul.u32 %s377, 3
      %s382 = smul.u32 %s381, 8
      %s383 = sadd.s32 %s382, %s380
      %s384 = scalar_lea.vmem [#allocation3], %s383
      %v385 = vld [vmem:[%s384] ss:$8 sm:$0x7]
      %v386 = vadd.f32 %v373, %v385
      %v387 = vtanh.pop %v386
      %v389 = vlaneseq
      %v390 = vshrl.u32 %v389, 7
      %v391 = vsub.s32 1, %v390
      %v392 = vrot.slane %v385, %v391
      %v394 = vadd.f32 %v375, %v392
      %v395 = vtanh.pop %v394
      %v396 = vtanh.pop %v273
      %v397 = vmul.f32 %v387, %v396
      %v398 = vlaneseq
      %v399 = vshrl.u32 %v398, 7
      %v400 = vsub.s32 2, %v399
      %v401 = vrot.slane %v385, %v400
      %v403 = vmul.f32 %v395, %v401
      %v404 = vadd.f32 %v397, %v403
      %s405 = scalar_lea.vmem [#allocation9], %s268
      %406 = vst [vmem:[%s405] sm:$0x1] %v404
    $region38: #{tpu_custom_call.1} parent=1 // loop_footer
      %s272 = sadd.s32 1, %s268
    $region39: #{tpu_custom_call.1} parent=1 // loop_footer_branch
      %267 = sbr.rel target = $region35
    $region40: #{tpu_custom_call.1} parent=1 // loop_exit
      _
    %407 = vst [vmem:[#allocation2] sm:$0x1] %v273
    // Predicated region
    $region41: #{tpu_custom_call.1} parent=1 // pred_check
      _
    $region42: #{tpu_custom_call.1} parent=1 // pred_check_branch
      %409 = sbr.rel (0) target = $region44
    $region43: #{tpu_custom_call.1} parent=1 // pred_region
      %s411 = ssub.s32 128, 128
      %412 = vsyncadd [#allocation6], %s411
      %s414 = sshll.u32 [#allocation9], 4
      %s415 = int_to_ptr.vmem [resolvable:$true] %s414
      %417 = dma.vmem_to_hbm [thread:$0]  %s415, 128, %s5, [#allocation6]
    $region44: #{tpu_custom_call.1} parent=1 // pred_fallthru
      _
    // Predicated region
    $region45: #{tpu_custom_call.1} parent=1 // pred_check
      _
    $region46: #{tpu_custom_call.1} parent=1 // pred_check_branch
      %419 = sbr.rel (0) target = $region48
    $region47: #{tpu_custom_call.1} parent=1 // pred_region
      %420 = dma.done [#allocation6], 128
    $region48: #{tpu_custom_call.1} parent=1 // pred_fallthru
      _
    %421 = vsyncpa [#allocation5], 1
    %422 = vsyncpa [#allocation8], 1
    %423 = vsyncpa [#allocation6], 1

</llo_original>
